<compile_context>
chip_gen: v5e
topology: v5e:2x2
jax: 0.10.0
libtpu: 0.0.40
codegen_flags: <defaults>
</compile_context>

<pallas_src>
import jax
import jax.numpy as jnp
from jax.experimental import pallas as pl
from jax.experimental.pallas import tpu as pltpu


def _normalize_kernel(mean_ref, inv_std_ref, x_ref, o_ref):
    # mean_ref / inv_std_ref: (r_block, 1) f32; x_ref / o_ref: (r_block, s_block).
    o_ref[...] = ((x_ref[...] - mean_ref[...]) * inv_std_ref[...]).astype(o_ref.dtype)


def imagenet_normalize(x, mean, std, *, target_block_bytes=6 * 1024 * 1024):
    """x: [N, C, H, W]; mean/std: [C]. Returns (x - mean[c]) / std[c], same dtype as x."""
    N, C, H, W = x.shape
    R = N * C
    S = H * W
    LANE, SUB = 128, 8

    # Free, contiguous reshape to a dense 2D view: rows = (n, c), lanes = spatial.
    x2 = x.reshape(R, S)

    # Per-row stats (tiny, N*C elements each), tiled over the batch dimension.
    mean_rows = jnp.tile(jnp.asarray(mean, jnp.float32), N).reshape(R, 1)
    inv_std_rows = jnp.tile(1.0 / jnp.asarray(std, jnp.float32), N).reshape(R, 1)

    elem_bytes = jnp.dtype(x.dtype).itemsize
    target_elems = max(LANE * SUB, target_block_bytes // elem_bytes)

    # Spatial block: multiple of 128 (or the full S when S < 128).
    if S < LANE:
        s_block = S
    else:
        s_cap = max(LANE, (target_elems // SUB) // LANE * LANE)
        s_block = min((S // LANE) * LANE, s_cap)

    # Row block: multiple of 8 (or the full N*C when N*C < 8), sized so
    # r_block * s_block ~= target_elems.
    if R < SUB:
        r_block = R
    else:
        r_block = max(SUB, (target_elems // s_block) // SUB * SUB)
        r_block = min(r_block, (R // SUB) * SUB)

    grid = (pl.cdiv(R, r_block), pl.cdiv(S, s_block))

    out = pl.pallas_call(
        _normalize_kernel,
        out_shape=jax.ShapeDtypeStruct((R, S), x.dtype),
        grid=grid,
        in_specs=[
            pl.BlockSpec((r_block, 1), lambda r, s: (r, 0)),      # stays resident over s
            pl.BlockSpec((r_block, 1), lambda r, s: (r, 0)),      # stays resident over s
            pl.BlockSpec((r_block, s_block), lambda r, s: (r, s)),
        ],
        out_specs=pl.BlockSpec((r_block, s_block), lambda r, s: (r, s)),
        compiler_params=pltpu.CompilerParams(
            dimension_semantics=("parallel", "parallel"),
            vmem_limit_bytes=48 * 1024 * 1024,
        ),
    )(mean_rows, inv_std_rows, x2)

    return out.reshape(N, C, H, W)


class ImageNetNormalization:
    """JAX/Pallas port of the PyTorch ImageNetNormalization module."""

    def __init__(self, mean=(0.485, 0.456, 0.406), std=(0.229, 0.224, 0.225)):
        self.mean = jnp.asarray(mean, dtype=jnp.float32)
        self.std = jnp.asarray(std, dtype=jnp.float32)

    def __call__(self, x):
        return imagenet_normalize(x, self.mean, self.std)


if __name__ == "__main__":
    key = jax.random.PRNGKey(0)
    # Small ImageNet-like input: batch=2, channels=3 (RGB), spatial=16x16.
    x = jax.random.uniform(key, (2, 3, 16, 16), dtype=jnp.float32)

    module = ImageNetNormalization()
    out = module(x)
    out = jax.block_until_ready(out)

    # Reference check (plain JAX broadcasting, same semantics as torchvision normalize).
    ref = (x - module.mean[None, :, None, None]) / module.std[None, :, None, None]
    assert out.shape == x.shape and out.dtype == x.dtype
    assert jnp.allclose(out, ref, atol=1e-5, rtol=1e-5)

    print("KERNEL_OK")
</pallas_src>

<mosaic_0001>
module attributes {stable_mosaic.version = 11 : i64} {
  func.func @_normalize_kernel(%arg0: i32, %arg1: i32, %arg2: memref<6x1xf32, #tpu.memory_space<vmem>>, %arg3: memref<6x1xf32, #tpu.memory_space<vmem>>, %arg4: memref<6x256xf32, #tpu.memory_space<vmem>>, %arg5: memref<6x256xf32, #tpu.memory_space<vmem>>) attributes {dimension_semantics = [#tpu.dimension_semantics<parallel>, #tpu.dimension_semantics<parallel>], iteration_bounds = array<i64: 1, 1>, scalar_prefetch = 0 : i64, scratch_operands = 0 : i64, tpu.core_type = #tpu.core_type<tc>, window_params = [{transform_indices = @transform_0, window_bounds = array<i64: 6, 1>}, {transform_indices = @transform_1, window_bounds = array<i64: 6, 1>}, {transform_indices = @transform_2, window_bounds = array<i64: 6, 256>}, {transform_indices = @transform_3, window_bounds = array<i64: 6, 256>}]} {
    %c0 = arith.constant 0 : index
    %c0_0 = arith.constant 0 : index
    %0 = vector.load %arg4[%c0, %c0_0] : memref<6x256xf32, #tpu.memory_space<vmem>>, vector<6x256xf32>
    %c0_1 = arith.constant 0 : index
    %c0_2 = arith.constant 0 : index
    %1 = vector.load %arg2[%c0_1, %c0_2] : memref<6x1xf32, #tpu.memory_space<vmem>>, vector<6x1xf32>
    %2 = vector.broadcast %1 : vector<6x1xf32> to vector<6x256xf32>
    %3 = arith.subf %0, %2 : vector<6x256xf32>
    %c0_3 = arith.constant 0 : index
    %c0_4 = arith.constant 0 : index
    %4 = vector.load %arg3[%c0_3, %c0_4] : memref<6x1xf32, #tpu.memory_space<vmem>>, vector<6x1xf32>
    %5 = vector.broadcast %4 : vector<6x1xf32> to vector<6x256xf32>
    %6 = arith.mulf %3, %5 : vector<6x256xf32>
    %c0_5 = arith.constant 0 : index
    %c0_6 = arith.constant 0 : index
    %7 = vector.load %arg5[%c0_5, %c0_6] : memref<6x256xf32, #tpu.memory_space<vmem>>, vector<6x256xf32>
    tpu.vector_store %arg5[%c0_5, %c0_6], %6 {strides = array<i32>} : memref<6x256xf32, #tpu.memory_space<vmem>>, vector<6x256xf32>,
    return
  }
  func.func @transform_0(%arg0: i32, %arg1: i32) -> (i32, i32) {
    %c0_i32 = arith.constant 0 : i32
    %c0_i32_0 = arith.constant 0 : i32
    return %arg0, %c0_i32 : i32, i32
  }
  func.func @transform_1(%arg0: i32, %arg1: i32) -> (i32, i32) {
    %c0_i32 = arith.constant 0 : i32
    %c0_i32_0 = arith.constant 0 : i32
    return %arg0, %c0_i32 : i32, i32
  }
  func.func @transform_2(%arg0: i32, %arg1: i32) -> (i32, i32) {
    %c0_i32 = arith.constant 0 : i32
    return %arg0, %arg1 : i32, i32
  }
  func.func @transform_3(%arg0: i32, %arg1: i32) -> (i32, i32) {
    %c0_i32 = arith.constant 0 : i32
    return %arg0, %arg1 : i32, i32
  }
}

</mosaic_0001>

<llo_original>
// kernel: tpu_custom_call.1
$region0: #{tpu_custom_call.1}
  #allocation0 [shape = 'u32[]', space=smem, size = 0x4, offset = 0x4, fixed_abs, tag = 'smem constant byte address 0x4 - core index']
  #allocation1 [shape = 'u32[72,128]{1,0:T(1,128)}', space=vmem, size = 0x9000, scoped, tag = 'internal scratch']
  %s0 = inlined_call_operand.vmem [shape: f32[6,1], index: 0, kind: input, shape index: {}]
  %s1 = inlined_call_operand.vmem [shape: f32[6,1], index: 1, kind: input, shape index: {}]
  %s2 = inlined_call_operand.vmem [shape: f32[6,256], index: 2, kind: input, shape index: {}]
  %s3 = inlined_call_operand.hbm [shape: f32[6,256], index: 3, kind: output, shape index: {}]
  %s4 = sld [smem:[#allocation0]]
  $region22: #{tpu_custom_call.1} parent=0
    _
  %s6 = ssub.s32 1, %s4
  %s7 = scalar_select 0, %s6, %s4
  $region1: #{tpu_custom_call.1} parent=0
    #allocation2 [shape = 'u8[8192]{0}', space=vmem, size = 0x2000, scoped, tag = 'output window, operand 0, single buffered']
    #allocation3 [shape = 's32[1]{0}', space=sflag, size = 0x4, scoped, tag = 'scoped memory for tpu_custom_call.1']
    %8 = vsyncpa [#allocation3], 0
    // Predicated region
    $region2: #{tpu_custom_call.1} parent=1 // pred_check
      _
    $region3: #{tpu_custom_call.1} parent=1 // pred_check_branch
      %10 = sbr.rel (0) target = $region5
    $region4: #{tpu_custom_call.1} parent=1 // pred_region
      _
    $region5: #{tpu_custom_call.1} parent=1 // pred_fallthru
      _
    // Predicated region
    $region6: #{tpu_custom_call.1} parent=1 // pred_check
      _
    $region7: #{tpu_custom_call.1} parent=1 // pred_check_branch
      %12 = sbr.rel (0) target = $region9
    $region8: #{tpu_custom_call.1} parent=1 // pred_region
      _
    $region9: #{tpu_custom_call.1} parent=1 // pred_fallthru
      _
    // Predicated region
    $region10: #{tpu_custom_call.1} parent=1 // pred_check
      _
    $region11: #{tpu_custom_call.1} parent=1 // pred_check_branch
      %14 = sbr.rel (0) target = $region13
    $region12: #{tpu_custom_call.1} parent=1 // pred_region
      _
    $region13: #{tpu_custom_call.1} parent=1 // pred_fallthru
      _
    %v15 = vld [vmem:[%s2] sm:$0x3f]
    %v16 = vld [vmem:[%s2 + $0x8] sm:$0x3f]
    %v17 = vld [vmem:[%s0] sm:$0x3f]
    %19 = vset.pattern.permute.xlu0 0
    %20 = vperm.xlu0 %19, %v17
    %v21 = vpop.permute.xlu0 %20
    %v23 = vsub.f32 %v15, %v21
    %v24 = vsub.f32 %v16, %v21
    %v25 = vld [vmem:[%s1] sm:$0x3f]
    %27 = vset.pattern.permute.xlu0 0
    %28 = vperm.xlu0 %27, %v25
    %v29 = vpop.permute.xlu0 %28
    %v31 = vmul.f32 %v23, %v29
    %v32 = vmul.f32 %v24, %v29
    %33 = vst [vmem:[#allocation2] sm:$0x3f] %v31
    %34 = vst [vmem:[#allocation2 + $0x8] sm:$0x3f] %v32
    // Predicated region
    $region14: #{tpu_custom_call.1} parent=1 // pred_check
      _
    $region15: #{tpu_custom_call.1} parent=1 // pred_check_branch
      %36 = sbr.rel (0) target = $region17
    $region16: #{tpu_custom_call.1} parent=1 // pred_region
      %38 = vsyncadd [#allocation3], 0
      %s40 = sshll.u32 [#allocation2], 4
      %s41 = int_to_ptr.vmem [resolvable:$true] %s40
      %s42 = sshll.u32 %s3, 4
      %s43 = int_to_ptr.hbm [resolvable:$true] %s42
      %45 = dma.vmem_to_hbm [thread:$0]  %s41, 256, %s43, [#allocation3]
    $region17: #{tpu_custom_call.1} parent=1 // pred_fallthru
      _
    // Predicated region
    $region18: #{tpu_custom_call.1} parent=1 // pred_check
      _
    $region19: #{tpu_custom_call.1} parent=1 // pred_check_branch
      %47 = sbr.rel (0) target = $region21
    $region20: #{tpu_custom_call.1} parent=1 // pred_region
      %49 = dma.done [#allocation3], 256
    $region21: #{tpu_custom_call.1} parent=1 // pred_fallthru
      _
    %50 = vsyncpa [#allocation3], 1

</llo_original>
